<compile_context>
chip_gen: v6e
topology: v6e:2x2x1
jax: 0.10.0
libtpu: 0.0.40
codegen_flags: <defaults>
</compile_context>

<pallas_src>
import jax
import jax.numpy as jnp
from jax.experimental import pallas as pl
from jax.experimental.pallas import tpu as pltpu


def _mul_weight_kernel(x_ref, w_ref, o_ref):
    # x_ref/o_ref: (TM, TN) VMEM tiles; w_ref: (TM, 1) per-row scales.
    # Broadcast multiply over lanes -- pure VPU work, full vreg occupancy.
    o_ref[...] = x_ref[...] * w_ref[...]


def _choose_block(dim, align, cap):
    """Largest divisor of `dim` that is a multiple of `align` and <= cap.
    Falls back to the full extent, which is always a legal block size."""
    if dim <= cap:
        return dim
    t = (cap // align) * align
    while t >= align:
        if dim % t == 0:
            return t
        t -= align
    return dim


def mul_weight(x, weights):
    """x: [B, C, H, W] (C == 3), weights: [C] scalars. Returns [B, C, H, W]."""
    B, C, H, W = x.shape
    assert weights.shape == (C,)
    R, L = B * C, H * W

    # Zero-cost reshape of the contiguous NCHW tensor to a lane-dense 2D slab;
    # each row is one (batch, channel) plane.
    x2 = x.reshape(R, L)
    # Per-row weight vector aligned with the row order of x2: [w0,w1,w2]*B.
    w_rows = jnp.tile(weights.astype(x.dtype), B).reshape(R, 1)

    itemsize = jnp.dtype(x.dtype).itemsize
    sublane = 8 * max(4 // itemsize, 1)  # 8 for f32, 16 for bf16, 32 for int8
    # Tile targets: <= ~4 MiB per input tile so double-buffered in+out stays
    # well under the default scoped VMEM limit on every generation (including
    # v7x's 64 MiB physical VMEM), while staying past the 512+-lane BW knee.
    tn_cap = 2048
    tm_cap = max(sublane, (4 * 1024 * 1024 // itemsize) // tn_cap)

    TN = _choose_block(L, 128, tn_cap)
    TM = _choose_block(R, sublane, tm_cap)

    grid = (R // TM, L // TN)

    out2 = pl.pallas_call(
        _mul_weight_kernel,
        out_shape=jax.ShapeDtypeStruct((R, L), x.dtype),
        grid_spec=pl.GridSpec(
            grid=grid,
            in_specs=[
                pl.BlockSpec((TM, TN), lambda i, j: (i, j)),
                pl.BlockSpec((TM, 1), lambda i, j: (i, 0)),
            ],
            out_specs=pl.BlockSpec((TM, TN), lambda i, j: (i, j)),
        ),
        compiler_params=pltpu.CompilerParams(
            # Every output block is independent (nothing accumulates), so both
            # grid axes are parallel: lets the grid shard across v7x's two
            # TensorCores; neutral on single-TC v5e/v6e.
            dimension_semantics=("parallel", "parallel"),
        ),
        cost_estimate=pl.CostEstimate(
            flops=R * L,
            transcendentals=0,
            bytes_accessed=2 * R * L * itemsize + R * itemsize,
        ),
    )(x2, w_rows)

    return out2.reshape(B, C, H, W)


if __name__ == "__main__":
    key = jax.random.PRNGKey(0)
    B, C, H, W = 2, 3, 16, 16
    x = jax.random.normal(key, (B, C, H, W), dtype=jnp.float32)

    # Deterministic per-channel scalar weights (module __init__ takes weight[0..2]).
    weights = jnp.array([0.5, 1.5, 2.0], dtype=jnp.float32)

    out = mul_weight(x, weights)
    out = jax.block_until_ready(out)

    # Reference check (plain JAX), mirrors the PyTorch forward exactly.
    ref = jnp.stack(
        [x[:, 0] * weights[0], x[:, 1] * weights[1], x[:, 2] * weights[2]], axis=1
    )
    assert out.shape == (B, C, H, W)
    assert jnp.allclose(out, ref, atol=1e-6), "mismatch vs reference"

    print("KERNEL_OK")
</pallas_src>

<mosaic_0001>
module attributes {stable_mosaic.version = 11 : i64} {
  func.func @_mul_weight_kernel(%arg0: i32, %arg1: i32, %arg2: memref<6x256xf32, #tpu.memory_space<vmem>>, %arg3: memref<6x1xf32, #tpu.memory_space<vmem>>, %arg4: memref<6x256xf32, #tpu.memory_space<vmem>>) attributes {dimension_semantics = [#tpu.dimension_semantics<parallel>, #tpu.dimension_semantics<parallel>], iteration_bounds = array<i64: 1, 1>, scalar_prefetch = 0 : i64, scratch_operands = 0 : i64, tpu.core_type = #tpu.core_type<tc>, window_params = [{transform_indices = @transform_0, window_bounds = array<i64: 6, 256>}, {transform_indices = @transform_1, window_bounds = array<i64: 6, 1>}, {transform_indices = @transform_2, window_bounds = array<i64: 6, 256>}]} {
    %c0 = arith.constant 0 : index
    %c0_0 = arith.constant 0 : index
    %0 = vector.load %arg2[%c0, %c0_0] : memref<6x256xf32, #tpu.memory_space<vmem>>, vector<6x256xf32>
    %c0_1 = arith.constant 0 : index
    %c0_2 = arith.constant 0 : index
    %1 = vector.load %arg3[%c0_1, %c0_2] : memref<6x1xf32, #tpu.memory_space<vmem>>, vector<6x1xf32>
    %2 = vector.broadcast %1 : vector<6x1xf32> to vector<6x256xf32>
    %3 = arith.mulf %0, %2 : vector<6x256xf32>
    %c0_3 = arith.constant 0 : index
    %c0_4 = arith.constant 0 : index
    %4 = vector.load %arg4[%c0_3, %c0_4] : memref<6x256xf32, #tpu.memory_space<vmem>>, vector<6x256xf32>
    tpu.vector_store %arg4[%c0_3, %c0_4], %3 {strides = array<i32>} : memref<6x256xf32, #tpu.memory_space<vmem>>, vector<6x256xf32>,
    return
  }
  func.func @transform_0(%arg0: i32, %arg1: i32) -> (i32, i32) {
    %c0_i32 = arith.constant 0 : i32
    return %arg0, %arg1 : i32, i32
  }
  func.func @transform_1(%arg0: i32, %arg1: i32) -> (i32, i32) {
    %c0_i32 = arith.constant 0 : i32
    %c0_i32_0 = arith.constant 0 : i32
    return %arg0, %c0_i32 : i32, i32
  }
  func.func @transform_2(%arg0: i32, %arg1: i32) -> (i32, i32) {
    %c0_i32 = arith.constant 0 : i32
    return %arg0, %arg1 : i32, i32
  }
}

</mosaic_0001>

<llo_original>
// kernel: tpu_custom_call.1
$region0: #{tpu_custom_call.1}
  #allocation0 [shape = 'u32[]', space=smem, size = 0x4, offset = 0x4, fixed_abs, tag = 'smem constant byte address 0x4 - core index']
  #allocation1 [shape = 'u32[144,128]{1,0:T(1,128)}', space=vmem, size = 0x12000, scoped, tag = 'internal scratch']
  %s0 = inlined_call_operand.hbm [shape: f32[6,256], index: 0, kind: input, shape index: {}]
  %s1 = inlined_call_operand.vmem [shape: f32[6,1], index: 1, kind: input, shape index: {}]
  %s2 = inlined_call_operand.hbm [shape: f32[6,256], index: 2, kind: output, shape index: {}]
  %s3 = sld [smem:[#allocation0]]
  $region22: #{tpu_custom_call.1} parent=0
    _
  %s5 = ssub.s32 1, %s3
  %s6 = scalar_select 0, %s5, %s3
  $region1: #{tpu_custom_call.1} parent=0
    #allocation2 [shape = 'u8[8192]{0}', space=vmem, size = 0x2000, scoped, tag = 'input window, operand 0, single buffered']
    #allocation3 [shape = 's32[1]{0}', space=sflag, size = 0x4, scoped, tag = 'scoped memory for tpu_custom_call.1']
    #allocation4 [shape = 's32[1]{0}', space=sflag, size = 0x4, scoped, tag = 'scoped memory for tpu_custom_call.1']
    #allocation5 [shape = 'u8[8192]{0}', space=vmem, size = 0x2000, scoped, tag = 'output window, operand 0, single buffered']
    %7 = vsyncpa [#allocation3], 0
    %8 = vsyncpa [#allocation4], 0
    // Predicated region
    $region2: #{tpu_custom_call.1} parent=1 // pred_check
      _
    $region3: #{tpu_custom_call.1} parent=1 // pred_check_branch
      %10 = sbr.rel (0) target = $region5
    $region4: #{tpu_custom_call.1} parent=1 // pred_region
      %s12 = ssub.s32 256, 256
      %13 = vsyncadd [#allocation3], %s12
      %s15 = sshll.u32 [#allocation2], 4
      %s16 = int_to_ptr.vmem [resolvable:$true] %s15
      %18 = dma.hbm_to_vmem [thread:$0]  %s0, 256, %s16, [#allocation3]
    $region5: #{tpu_custom_call.1} parent=1 // pred_fallthru
      _
    // Predicated region
    $region6: #{tpu_custom_call.1} parent=1 // pred_check
      _
    $region7: #{tpu_custom_call.1} parent=1 // pred_check_branch
      %20 = sbr.rel (0) target = $region9
    $region8: #{tpu_custom_call.1} parent=1 // pred_region
      _
    $region9: #{tpu_custom_call.1} parent=1 // pred_fallthru
      _
    // Predicated region
    $region10: #{tpu_custom_call.1} parent=1 // pred_check
      _
    $region11: #{tpu_custom_call.1} parent=1 // pred_check_branch
      %22 = sbr.rel (0) target = $region13
    $region12: #{tpu_custom_call.1} parent=1 // pred_region
      %23 = dma.done [#allocation3], 256
    $region13: #{tpu_custom_call.1} parent=1 // pred_fallthru
      _
    %v24 = vld [vmem:[#allocation2] sm:$0x3f]
    %v25 = vld [vmem:[#allocation2 + $0x8] sm:$0x3f]
    %v26 = vld [vmem:[%s1] sm:$0x3f]
    %28 = vset.pattern.permute.xlu0 0
    %29 = vperm.xlu0 %28, %v26
    %v30 = vpop.permute.xlu0 %29
    %v32 = vmul.f32 %v24, %v30
    %v33 = vmul.f32 %v25, %v30
    %34 = vst [vmem:[#allocation5] sm:$0x3f] %v32
    %35 = vst [vmem:[#allocation5 + $0x8] sm:$0x3f] %v33
    // Predicated region
    $region14: #{tpu_custom_call.1} parent=1 // pred_check
      _
    $region15: #{tpu_custom_call.1} parent=1 // pred_check_branch
      %37 = sbr.rel (0) target = $region17
    $region16: #{tpu_custom_call.1} parent=1 // pred_region
      %s39 = ssub.s32 256, 256
      %40 = vsyncadd [#allocation4], %s39
      %s42 = sshll.u32 [#allocation5], 4
      %s43 = int_to_ptr.vmem [resolvable:$true] %s42
      %45 = dma.vmem_to_hbm [thread:$0]  %s43, 256, %s2, [#allocation4]
    $region17: #{tpu_custom_call.1} parent=1 // pred_fallthru
      _
    // Predicated region
    $region18: #{tpu_custom_call.1} parent=1 // pred_check
      _
    $region19: #{tpu_custom_call.1} parent=1 // pred_check_branch
      %47 = sbr.rel (0) target = $region21
    $region20: #{tpu_custom_call.1} parent=1 // pred_region
      %48 = dma.done [#allocation4], 256
    $region21: #{tpu_custom_call.1} parent=1 // pred_fallthru
      _
    %49 = vsyncpa [#allocation3], 1
    %50 = vsyncpa [#allocation4], 1

</llo_original>
